<compile_context>
chip_gen: v7x
topology: tpu7x:2x2x1
jax: 0.10.0
libtpu: 0.0.40
codegen_flags: <defaults>
</compile_context>

<pallas_src>
import jax
import jax.numpy as jnp
from jax.experimental import pallas as pl
from jax.experimental.pallas import tpu as pltpu

HIDDEN = 256
HEAD_PAD = 128  # value head padded from 1 -> 128 lanes for dense stores


def _critic_kernel(s_ref, a_ref,
                   w1s_ref, w1a_ref, b1_ref,
                   w2_ref, b2_ref,
                   w3_ref, b3_ref,
                   out_ref):
    # fc1 on the concatenated input, expressed as two bf16 MXU matmuls with
    # f32 accumulation (W1 split along its input axis avoids a lane concat).
    s = s_ref[...].astype(jnp.bfloat16)
    a = a_ref[...].astype(jnp.bfloat16)
    h1 = (jnp.dot(s, w1s_ref[...], preferred_element_type=jnp.float32)
          + jnp.dot(a, w1a_ref[...], preferred_element_type=jnp.float32)
          + b1_ref[...])
    h1 = jnp.maximum(h1, 0.0)                       # ReLU in f32 (v5e: no bf16 VPU)

    # fc2 + ReLU
    h2 = (jnp.dot(h1.astype(jnp.bfloat16), w2_ref[...],
                  preferred_element_type=jnp.float32)
          + b2_ref[...])
    h2 = jnp.maximum(h2, 0.0)

    # fc3 (value head), padded to 128 lanes -> lane-dense store.
    out_ref[...] = (jnp.dot(h2.astype(jnp.bfloat16), w3_ref[...],
                            preferred_element_type=jnp.float32)
                    + b3_ref[...]).astype(out_ref.dtype)


def _round_up(x, m):
    return (x + m - 1) // m * m


def critic_forward(state, action, params, *, block_b=1024):
    """state: [B, state_dim], action: [B, action_dim] -> value: [B, 1] (f32)."""
    w1s, w1a, b1, w2, b2, w3, b3 = params
    B, state_dim = state.shape
    action_dim = action.shape[1]

    # Batch tile: large for pipeline efficiency, rounded to the f32 sublane
    # tile (8); pad ragged batches with zero rows and slice them off after.
    tb = min(block_b, _round_up(B, 8))
    bp = _round_up(B, tb)
    if bp != B:
        state = jnp.pad(state, ((0, bp - B), (0, 0)))
        action = jnp.pad(action, ((0, bp - B), (0, 0)))
    grid = (bp // tb,)

    flops = 2 * bp * ((state_dim + action_dim) * HIDDEN
                      + HIDDEN * HIDDEN
                      + HIDDEN * HEAD_PAD)
    bytes_accessed = (state.size * state.dtype.itemsize
                      + action.size * action.dtype.itemsize
                      + sum(p.size * p.dtype.itemsize for p in params)
                      + bp * HEAD_PAD * 4)
    cost = pl.CostEstimate(flops=flops, transcendentals=0,
                           bytes_accessed=bytes_accessed)

    out = pl.pallas_call(
        _critic_kernel,
        out_shape=jax.ShapeDtypeStruct((bp, HEAD_PAD), jnp.float32),
        grid=grid,
        in_specs=[
            # Activation tiles stream over the batch grid.
            pl.BlockSpec((tb, state_dim), lambda i: (i, 0)),
            pl.BlockSpec((tb, action_dim), lambda i: (i, 0)),
            # Weights / biases: constant block index -> stay resident in VMEM.
            pl.BlockSpec(w1s.shape, lambda i: (0, 0)),
            pl.BlockSpec(w1a.shape, lambda i: (0, 0)),
            pl.BlockSpec(b1.shape, lambda i: (0, 0)),
            pl.BlockSpec(w2.shape, lambda i: (0, 0)),
            pl.BlockSpec(b2.shape, lambda i: (0, 0)),
            pl.BlockSpec(w3.shape, lambda i: (0, 0)),
            pl.BlockSpec(b3.shape, lambda i: (0, 0)),
        ],
        out_specs=pl.BlockSpec((tb, HEAD_PAD), lambda i: (i, 0)),
        compiler_params=pltpu.CompilerParams(
            dimension_semantics=("parallel",),      # megacore sharding on v7x
            vmem_limit_bytes=32 * 1024 * 1024,      # safe on v5e/v6e/v7x
        ),
        cost_estimate=cost,
    )(state, action, w1s, w1a, b1, w2, b2, w3, b3)

    return out[:B, :1]


def init_params(key, state_dim, action_dim, hidden=HIDDEN):
    """PyTorch-style (uniform +/- 1/sqrt(fan_in)) init.

    Weights are stored bf16 (MXU operands, half the DMA bytes); biases stay
    f32 so the accumulate / ReLU path is f32. W1 is split along its input
    axis; the value head is zero-padded to 128 output columns.
    """
    in_dim = state_dim + action_dim

    def linear(key, fan_in, fan_out):
        kw, kb = jax.random.split(key)
        bound = 1.0 / jnp.sqrt(jnp.float32(fan_in))
        w = jax.random.uniform(kw, (fan_in, fan_out), jnp.float32, -bound, bound)
        b = jax.random.uniform(kb, (1, fan_out), jnp.float32, -bound, bound)
        return w, b

    k1, k2, k3 = jax.random.split(key, 3)
    w1, b1 = linear(k1, in_dim, hidden)
    w2, b2 = linear(k2, hidden, hidden)
    w3, b3 = linear(k3, hidden, 1)

    w1s, w1a = w1[:state_dim, :], w1[state_dim:, :]
    w3p = jnp.pad(w3, ((0, 0), (0, HEAD_PAD - 1)))   # zero columns 1..127
    b3p = jnp.pad(b3, ((0, 0), (0, HEAD_PAD - 1)))

    bf16 = lambda x: x.astype(jnp.bfloat16)
    return (bf16(w1s), bf16(w1a), b1, bf16(w2), b2, bf16(w3p), b3p)


def critic_reference(state, action, params):
    """Pure-JAX reference mirroring the kernel's bf16-operand / f32-acc math."""
    w1s, w1a, b1, w2, b2, w3, b3 = params
    s = state.astype(jnp.bfloat16)
    a = action.astype(jnp.bfloat16)
    h1 = (jnp.dot(s, w1s, preferred_element_type=jnp.float32)
          + jnp.dot(a, w1a, preferred_element_type=jnp.float32) + b1)
    h1 = jnp.maximum(h1, 0.0)
    h2 = jnp.dot(h1.astype(jnp.bfloat16), w2,
                 preferred_element_type=jnp.float32) + b2
    h2 = jnp.maximum(h2, 0.0)
    out = jnp.dot(h2.astype(jnp.bfloat16), w3,
                  preferred_element_type=jnp.float32) + b3
    return out[:, :1]


if __name__ == "__main__":
    B, state_dim, action_dim = 8, 16, 8

    key = jax.random.PRNGKey(0)
    k_state, k_action, k_params = jax.random.split(key, 3)
    state = jax.random.normal(k_state, (B, state_dim), jnp.float32)
    action = jax.random.normal(k_action, (B, action_dim), jnp.float32)
    params = init_params(k_params, state_dim, action_dim)

    value = critic_forward(state, action, params)
    jax.block_until_ready(value)

    ref = critic_reference(state, action, params)
    assert value.shape == (B, 1)
    assert jnp.allclose(value, ref, atol=2e-3, rtol=2e-3), (
        float(jnp.max(jnp.abs(value - ref))))

    print("KERNEL_OK")
</pallas_src>

<mosaic_0001>
module attributes {stable_mosaic.version = 11 : i64} {
  func.func @_critic_kernel(%arg0: i32, %arg1: memref<8x16xf32, #tpu.memory_space<vmem>>, %arg2: memref<8x8xf32, #tpu.memory_space<vmem>>, %arg3: memref<16x256xbf16, #tpu.memory_space<vmem>>, %arg4: memref<8x256xbf16, #tpu.memory_space<vmem>>, %arg5: memref<1x256xf32, #tpu.memory_space<vmem>>, %arg6: memref<256x256xbf16, #tpu.memory_space<vmem>>, %arg7: memref<1x256xf32, #tpu.memory_space<vmem>>, %arg8: memref<256x128xbf16, #tpu.memory_space<vmem>>, %arg9: memref<1x128xf32, #tpu.memory_space<vmem>>, %arg10: memref<8x128xf32, #tpu.memory_space<vmem>>) attributes {dimension_semantics = [#tpu.dimension_semantics<parallel>], iteration_bounds = array<i64: 1>, scalar_prefetch = 0 : i64, scratch_operands = 0 : i64, tpu.core_type = #tpu.core_type<tc>, window_params = [{transform_indices = @transform_0, window_bounds = array<i64: 8, 16>}, {transform_indices = @transform_1, window_bounds = array<i64: 8, 8>}, {pipeline_mode = #tpu.pipeline_mode<synchronous>, transform_indices = @transform_2, window_bounds = array<i64: 16, 256>}, {pipeline_mode = #tpu.pipeline_mode<synchronous>, transform_indices = @transform_3, window_bounds = array<i64: 8, 256>}, {pipeline_mode = #tpu.pipeline_mode<synchronous>, transform_indices = @transform_4, window_bounds = array<i64: 1, 256>}, {pipeline_mode = #tpu.pipeline_mode<synchronous>, transform_indices = @transform_5, window_bounds = array<i64: 256, 256>}, {pipeline_mode = #tpu.pipeline_mode<synchronous>, transform_indices = @transform_6, window_bounds = array<i64: 1, 256>}, {pipeline_mode = #tpu.pipeline_mode<synchronous>, transform_indices = @transform_7, window_bounds = array<i64: 256, 128>}, {pipeline_mode = #tpu.pipeline_mode<synchronous>, transform_indices = @transform_8, window_bounds = array<i64: 1, 128>}, {transform_indices = @transform_9, window_bounds = array<i64: 8, 128>}]} {
    %c0 = arith.constant 0 : index
    %c0_0 = arith.constant 0 : index
    %0 = vector.load %arg1[%c0, %c0_0] : memref<8x16xf32, #tpu.memory_space<vmem>>, vector<8x16xf32>
    %1 = arith.truncf %0 : vector<8x16xf32> to vector<8x16xbf16>
    %c0_1 = arith.constant 0 : index
    %c0_2 = arith.constant 0 : index
    %2 = vector.load %arg2[%c0_1, %c0_2] : memref<8x8xf32, #tpu.memory_space<vmem>>, vector<8x8xf32>
    %3 = arith.truncf %2 : vector<8x8xf32> to vector<8x8xbf16>
    %c0_3 = arith.constant 0 : index
    %c0_4 = arith.constant 0 : index
    %4 = vector.load %arg3[%c0_3, %c0_4] : memref<16x256xbf16, #tpu.memory_space<vmem>>, vector<16x256xbf16>
    %cst = arith.constant dense<0.000000e+00> : vector<8x256xf32>
    %5 = tpu.matmul %1, %4, %cst {dimension_numbers = #tpu.dot_dimension_numbers<[1], [0], [0], [1], [0, 0, 1, 1], [], []>} : vector<8x16xbf16>, vector<16x256xbf16>, vector<8x256xf32> -> vector<8x256xf32>
    %c0_5 = arith.constant 0 : index
    %c0_6 = arith.constant 0 : index
    %6 = vector.load %arg4[%c0_5, %c0_6] : memref<8x256xbf16, #tpu.memory_space<vmem>>, vector<8x256xbf16>
    %cst_7 = arith.constant dense<0.000000e+00> : vector<8x256xf32>
    %7 = tpu.matmul %3, %6, %cst_7 {dimension_numbers = #tpu.dot_dimension_numbers<[1], [0], [0], [1], [0, 0, 1, 1], [], []>} : vector<8x8xbf16>, vector<8x256xbf16>, vector<8x256xf32> -> vector<8x256xf32>
    %8 = arith.addf %5, %7 : vector<8x256xf32>
    %c0_8 = arith.constant 0 : index
    %c0_9 = arith.constant 0 : index
    %9 = vector.load %arg5[%c0_8, %c0_9] : memref<1x256xf32, #tpu.memory_space<vmem>>, vector<1x256xf32>
    %10 = vector.broadcast %9 : vector<1x256xf32> to vector<8x256xf32>
    %11 = arith.addf %8, %10 : vector<8x256xf32>
    %cst_10 = arith.constant 0.000000e+00 : f32
    %12 = vector.broadcast %cst_10 : f32 to vector<8x256xf32>
    %13 = arith.maximumf %11, %12 : vector<8x256xf32>
    %14 = arith.truncf %13 : vector<8x256xf32> to vector<8x256xbf16>
    %c0_11 = arith.constant 0 : index
    %c0_12 = arith.constant 0 : index
    %15 = vector.load %arg6[%c0_11, %c0_12] : memref<256x256xbf16, #tpu.memory_space<vmem>>, vector<256x256xbf16>
    %cst_13 = arith.constant dense<0.000000e+00> : vector<8x256xf32>
    %16 = tpu.matmul %14, %15, %cst_13 {dimension_numbers = #tpu.dot_dimension_numbers<[1], [0], [0], [1], [0, 0, 1, 1], [], []>} : vector<8x256xbf16>, vector<256x256xbf16>, vector<8x256xf32> -> vector<8x256xf32>
    %c0_14 = arith.constant 0 : index
    %c0_15 = arith.constant 0 : index
    %17 = vector.load %arg7[%c0_14, %c0_15] : memref<1x256xf32, #tpu.memory_space<vmem>>, vector<1x256xf32>
    %18 = vector.broadcast %17 : vector<1x256xf32> to vector<8x256xf32>
    %19 = arith.addf %16, %18 : vector<8x256xf32>
    %cst_16 = arith.constant 0.000000e+00 : f32
    %20 = vector.broadcast %cst_16 : f32 to vector<8x256xf32>
    %21 = arith.maximumf %19, %20 : vector<8x256xf32>
    %22 = arith.truncf %21 : vector<8x256xf32> to vector<8x256xbf16>
    %c0_17 = arith.constant 0 : index
    %c0_18 = arith.constant 0 : index
    %23 = vector.load %arg8[%c0_17, %c0_18] : memref<256x128xbf16, #tpu.memory_space<vmem>>, vector<256x128xbf16>
    %cst_19 = arith.constant dense<0.000000e+00> : vector<8x128xf32>
    %24 = tpu.matmul %22, %23, %cst_19 {dimension_numbers = #tpu.dot_dimension_numbers<[1], [0], [0], [1], [0, 0, 1, 1], [], []>} : vector<8x256xbf16>, vector<256x128xbf16>, vector<8x128xf32> -> vector<8x128xf32>
    %c0_20 = arith.constant 0 : index
    %c0_21 = arith.constant 0 : index
    %25 = vector.load %arg9[%c0_20, %c0_21] : memref<1x128xf32, #tpu.memory_space<vmem>>, vector<1x128xf32>
    %26 = vector.broadcast %25 : vector<1x128xf32> to vector<8x128xf32>
    %27 = arith.addf %24, %26 : vector<8x128xf32>
    %c0_22 = arith.constant 0 : index
    %c0_23 = arith.constant 0 : index
    %28 = vector.load %arg10[%c0_22, %c0_23] : memref<8x128xf32, #tpu.memory_space<vmem>>, vector<8x128xf32>
    tpu.vector_store %arg10[%c0_22, %c0_23], %27 {strides = array<i32>} : memref<8x128xf32, #tpu.memory_space<vmem>>, vector<8x128xf32>,
    return
  }
  func.func @transform_0(%arg0: i32) -> (i32, i32) {
    %c0_i32 = arith.constant 0 : i32
    %c0_i32_0 = arith.constant 0 : i32
    return %arg0, %c0_i32 : i32, i32
  }
  func.func @transform_1(%arg0: i32) -> (i32, i32) {
    %c0_i32 = arith.constant 0 : i32
    %c0_i32_0 = arith.constant 0 : i32
    return %arg0, %c0_i32 : i32, i32
  }
  func.func @transform_2(%arg0: i32) -> (i32, i32) {
    %c0_i32 = arith.constant 0 : i32
    %c0_i32_0 = arith.constant 0 : i32
    %c0_i32_1 = arith.constant 0 : i32
    return %c0_i32, %c0_i32_0 : i32, i32
  }
  func.func @transform_3(%arg0: i32) -> (i32, i32) {
    %c0_i32 = arith.constant 0 : i32
    %c0_i32_0 = arith.constant 0 : i32
    %c0_i32_1 = arith.constant 0 : i32
    return %c0_i32, %c0_i32_0 : i32, i32
  }
  func.func @transform_4(%arg0: i32) -> (i32, i32) {
    %c0_i32 = arith.constant 0 : i32
    %c0_i32_0 = arith.constant 0 : i32
    %c0_i32_1 = arith.constant 0 : i32
    return %c0_i32, %c0_i32_0 : i32, i32
  }
  func.func @transform_5(%arg0: i32) -> (i32, i32) {
    %c0_i32 = arith.constant 0 : i32
    %c0_i32_0 = arith.constant 0 : i32
    %c0_i32_1 = arith.constant 0 : i32
    return %c0_i32, %c0_i32_0 : i32, i32
  }
  func.func @transform_6(%arg0: i32) -> (i32, i32) {
    %c0_i32 = arith.constant 0 : i32
    %c0_i32_0 = arith.constant 0 : i32
    %c0_i32_1 = arith.constant 0 : i32
    return %c0_i32, %c0_i32_0 : i32, i32
  }
  func.func @transform_7(%arg0: i32) -> (i32, i32) {
    %c0_i32 = arith.constant 0 : i32
    %c0_i32_0 = arith.constant 0 : i32
    %c0_i32_1 = arith.constant 0 : i32
    return %c0_i32, %c0_i32_0 : i32, i32
  }
  func.func @transform_8(%arg0: i32) -> (i32, i32) {
    %c0_i32 = arith.constant 0 : i32
    %c0_i32_0 = arith.constant 0 : i32
    %c0_i32_1 = arith.constant 0 : i32
    return %c0_i32, %c0_i32_0 : i32, i32
  }
  func.func @transform_9(%arg0: i32) -> (i32, i32) {
    %c0_i32 = arith.constant 0 : i32
    %c0_i32_0 = arith.constant 0 : i32
    return %arg0, %c0_i32 : i32, i32
  }
}

</mosaic_0001>

<llo_original>
// kernel: tpu_custom_call.1
$region0: #{tpu_custom_call.1}
  #allocation0 [shape = 'u32[]', space=smem, size = 0x4, offset = 0x4, fixed_abs, tag = 'smem constant byte address 0x4 - core index']
  #allocation1 [shape = 'u32[144,128]{1,0:T(1,128)}', space=vmem, size = 0x12000, scoped, tag = 'internal scratch']
  %s0 = inlined_call_operand.hbm [shape: f32[8,16], index: 0, kind: input, shape index: {}]
  %s1 = inlined_call_operand.hbm [shape: f32[8,8], index: 1, kind: input, shape index: {}]
  %s2 = inlined_call_operand.hbm [shape: bf16[16,256], index: 2, kind: input, shape index: {}]
  %s3 = inlined_call_operand.vmem [shape: bf16[8,256], index: 3, kind: input, shape index: {}]
  %s4 = inlined_call_operand.vmem [shape: f32[1,256], index: 4, kind: input, shape index: {}]
  %s5 = inlined_call_operand.hbm [shape: bf16[256,256], index: 5, kind: input, shape index: {}]
  %s6 = inlined_call_operand.vmem [shape: f32[1,256], index: 6, kind: input, shape index: {}]
  %s7 = inlined_call_operand.hbm [shape: bf16[256,128], index: 7, kind: input, shape index: {}]
  %s8 = inlined_call_operand.vmem [shape: f32[1,128], index: 8, kind: input, shape index: {}]
  %s9 = inlined_call_operand.hbm [shape: f32[8,128], index: 9, kind: output, shape index: {}]
  %s10 = sld [smem:[#allocation0]]
  $region66: #{tpu_custom_call.1} parent=0
    _
  %s12 = ssub.s32 1, %s10
  %s13 = scalar_select 0, %s12, %s10
  $region1: #{tpu_custom_call.1} parent=0
    #allocation2 [shape = 'u8[4096]{0}', space=vmem, size = 0x1000, scoped, tag = 'input window, operand 0, single buffered']
    #allocation3 [shape = 's32[1]{0}', space=sflag, size = 0x4, scoped, tag = 'scoped memory for tpu_custom_call.1']
    #allocation4 [shape = 's32[1]{0}', space=sflag, size = 0x4, scoped, tag = 'scoped memory for tpu_custom_call.1']
    #allocation5 [shape = 'u8[4096]{0}', space=vmem, size = 0x1000, scoped, tag = 'input window, operand 1, single buffered']
    #allocation6 [shape = 's32[1]{0}', space=sflag, size = 0x4, scoped, tag = 'scoped memory for tpu_custom_call.1']
    #allocation7 [shape = 'u8[8192]{0}', space=vmem, size = 0x2000, scoped, tag = 'input window, operand 2, single buffered']
    #allocation8 [shape = 'u8[131072]{0}', space=vmem, size = 0x20000, scoped, tag = 'input window, operand 5, single buffered']
    #allocation9 [shape = 's32[1]{0}', space=sflag, size = 0x4, scoped, tag = 'scoped memory for tpu_custom_call.1']
    #allocation10 [shape = 'u8[65536]{0}', space=vmem, size = 0x10000, scoped, tag = 'input window, operand 7, single buffered']
    #allocation11 [shape = 'u8[4096]{0}', space=vmem, size = 0x1000, scoped, tag = 'output window, operand 0, single buffered']
    %14 = vsyncpa [#allocation3], 0
    %15 = vsyncpa [#allocation6], 0
    %16 = vsyncpa [#allocation9], 0
    %17 = vsyncpa [#allocation4], 0
    // Predicated region
    $region2: #{tpu_custom_call.1} parent=1 // pred_check
      _
    $region3: #{tpu_custom_call.1} parent=1 // pred_check_branch
      %19 = sbr.rel (0) target = $region5
    $region4: #{tpu_custom_call.1} parent=1 // pred_region
      %s21 = ssub.s32 128, 128
      %22 = vsyncadd [#allocation3], %s21
      %s24 = sshll.u32 [#allocation2], 4
      %s25 = int_to_ptr.vmem [resolvable:$true] %s24
      %27 = dma.hbm_to_vmem [thread:$0]  %s0, 128, %s25, [#allocation3]
    $region5: #{tpu_custom_call.1} parent=1 // pred_fallthru
      _
    // Predicated region
    $region6: #{tpu_custom_call.1} parent=1 // pred_check
      _
    $region7: #{tpu_custom_call.1} parent=1 // pred_check_branch
      %29 = sbr.rel (0) target = $region9
    $region8: #{tpu_custom_call.1} parent=1 // pred_region
      %s31 = ssub.s32 128, 128
      %32 = vsyncadd [#allocation6], %s31
      %s34 = sshll.u32 [#allocation5], 4
      %s35 = int_to_ptr.vmem [resolvable:$true] %s34
      %37 = dma.hbm_to_vmem [thread:$0]  %s1, 128, %s35, [#allocation6]
    $region9: #{tpu_custom_call.1} parent=1 // pred_fallthru
      _
    // Predicated region
    $region10: #{tpu_custom_call.1} parent=1 // pred_check
      _
    $region11: #{tpu_custom_call.1} parent=1 // pred_check_branch
      %39 = sbr.rel (0) target = $region13
    $region12: #{tpu_custom_call.1} parent=1 // pred_region
      %s41 = ssub.s32 256, 256
      %42 = vsyncadd [#allocation6], %s41
      %s43 = sshll.u32 [#allocation7], 4
      %s44 = int_to_ptr.vmem [resolvable:$true] %s43
      %49 = dma.hbm_to_vmem [thread:$0]  %s2, 256, %s44, [#allocation6], 128, 128, 8
    $region13: #{tpu_custom_call.1} parent=1 // pred_fallthru
      _
    // Predicated region
    $region14: #{tpu_custom_call.1} parent=1 // pred_check
      _
    $region15: #{tpu_custom_call.1} parent=1 // pred_check_branch
      %51 = sbr.rel (0) target = $region17
    $region16: #{tpu_custom_call.1} parent=1 // pred_region
      _
    $region17: #{tpu_custom_call.1} parent=1 // pred_fallthru
      _
    // Predicated region
    $region18: #{tpu_custom_call.1} parent=1 // pred_check
      _
    $region19: #{tpu_custom_call.1} parent=1 // pred_check_branch
      %53 = sbr.rel (0) target = $region21
    $region20: #{tpu_custom_call.1} parent=1 // pred_region
      _
    $region21: #{tpu_custom_call.1} parent=1 // pred_fallthru
      _
    // Predicated region
    $region22: #{tpu_custom_call.1} parent=1 // pred_check
      _
    $region23: #{tpu_custom_call.1} parent=1 // pred_check_branch
      %55 = sbr.rel (0) target = $region25
    $region24: #{tpu_custom_call.1} parent=1 // pred_region
      %s57 = ssub.s32 4096, 4096
      %58 = vsyncadd [#allocation9], %s57
      %s59 = sshll.u32 [#allocation8], 4
      %s60 = int_to_ptr.vmem [resolvable:$true] %s59
      %65 = dma.hbm_to_vmem [thread:$0]  %s5, 4096, %s60, [#allocation9], 128, 128, 8
    $region25: #{tpu_custom_call.1} parent=1 // pred_fallthru
      _
    // Predicated region
    $region26: #{tpu_custom_call.1} parent=1 // pred_check
      _
    $region27: #{tpu_custom_call.1} parent=1 // pred_check_branch
      %67 = sbr.rel (0) target = $region29
    $region28: #{tpu_custom_call.1} parent=1 // pred_region
      _
    $region29: #{tpu_custom_call.1} parent=1 // pred_fallthru
      _
    // Predicated region
    $region30: #{tpu_custom_call.1} parent=1 // pred_check
      _
    $region31: #{tpu_custom_call.1} parent=1 // pred_check_branch
      %69 = sbr.rel (0) target = $region33
    $region32: #{tpu_custom_call.1} parent=1 // pred_region
      %s71 = ssub.s32 2048, 2048
      %72 = vsyncadd [#allocation9], %s71
      %s73 = sshll.u32 [#allocation10], 4
      %s74 = int_to_ptr.vmem [resolvable:$true] %s73
      %79 = dma.hbm_to_vmem [thread:$0]  %s7, 2048, %s74, [#allocation9], 64, 64, 4
    $region33: #{tpu_custom_call.1} parent=1 // pred_fallthru
      _
    // Predicated region
    $region34: #{tpu_custom_call.1} parent=1 // pred_check
      _
    $region35: #{tpu_custom_call.1} parent=1 // pred_check_branch
      %81 = sbr.rel (0) target = $region37
    $region36: #{tpu_custom_call.1} parent=1 // pred_region
      _
    $region37: #{tpu_custom_call.1} parent=1 // pred_fallthru
      _
    // Predicated region
    $region38: #{tpu_custom_call.1} parent=1 // pred_check
      _
    $region39: #{tpu_custom_call.1} parent=1 // pred_check_branch
      %83 = sbr.rel (0) target = $region41
    $region40: #{tpu_custom_call.1} parent=1 // pred_region
      %84 = dma.done [#allocation3], 128
    $region41: #{tpu_custom_call.1} parent=1 // pred_fallthru
      _
    // Predicated region
    $region42: #{tpu_custom_call.1} parent=1 // pred_check
      _
    $region43: #{tpu_custom_call.1} parent=1 // pred_check_branch
      %86 = sbr.rel (0) target = $region45
    $region44: #{tpu_custom_call.1} parent=1 // pred_region
      %87 = dma.done [#allocation6], 128
    $region45: #{tpu_custom_call.1} parent=1 // pred_fallthru
      _
    // Predicated region
    $region46: #{tpu_custom_call.1} parent=1 // pred_check
      _
    $region47: #{tpu_custom_call.1} parent=1 // pred_check_branch
      %89 = sbr.rel (0) target = $region49
    $region48: #{tpu_custom_call.1} parent=1 // pred_region
      %90 = dma.done [#allocation6], 256
    $region49: #{tpu_custom_call.1} parent=1 // pred_fallthru
      _
    // Predicated region
    $region50: #{tpu_custom_call.1} parent=1 // pred_check
      _
    $region51: #{tpu_custom_call.1} parent=1 // pred_check_branch
      %92 = sbr.rel (0) target = $region53
    $region52: #{tpu_custom_call.1} parent=1 // pred_region
      %93 = dma.done [#allocation9], 4096
    $region53: #{tpu_custom_call.1} parent=1 // pred_fallthru
      _
    // Predicated region
    $region54: #{tpu_custom_call.1} parent=1 // pred_check
      _
    $region55: #{tpu_custom_call.1} parent=1 // pred_check_branch
      %95 = sbr.rel (0) target = $region57
    $region56: #{tpu_custom_call.1} parent=1 // pred_region
      %96 = dma.done [#allocation9], 2048
    $region57: #{tpu_custom_call.1} parent=1 // pred_fallthru
      _
    %v98 = vld [vmem:[#allocation2] sm:$0xff]
    %v99 = vpack.c.bf16 %v98, %v98
    %v100 = vld [vmem:[#allocation5] sm:$0xff]
    %v101 = vpack.c.bf16 %v100, %v100
    %v102 = vld [vmem:[#allocation7] sm:$0xff]
    %v103 = vld [vmem:[#allocation7 + $0x8] sm:$0xff]
    %v104 = vld [vmem:[%s3] sm:$0xff]
    %v106 = vunpack.c.l.b16 %v104
    %v107 = vunpack.c.h.b16 %v104
    %v108 = vpack.c.b16 %v106, %v106
    %v109 = vpack.c.b16 %v107, %v107
    %vm110 = vcmask 64512
    %v112 = vsel %vm110, %v101, 0
    %vm114 = vcmask 1043456
    %v116 = vsel %vm114, %v108, 0
    %v119 = vsel %vm114, %v109, 0
    %121 = vmatprep.subr.bf16.mxu0 %v119
    %122 = vmatpush1.bf16.msra.mxu0 %v116
    %123 = vmatprep.subr.bf16.mxu0 0
    %124 = vmatpush1.bf16.msra.mxu0 0
    %125 = vmatprep.subr.bf16.mxu0 0
    %126 = vmatpush1.bf16.msra.mxu0 0
    %127 = vmatprep.subr.bf16.mxu0 0
    %128 = vmatpush1.bf16.msra.mxu0 0
    %129 = vmatprep.subr.bf16.mxu0 0
    %130 = vmatpush1.bf16.msra.mxu0 0
    %131 = vmatprep.subr.bf16.mxu0 0
    %132 = vmatpush1.bf16.msra.mxu0 0
    %133 = vmatprep.subr.bf16.mxu0 0
    %134 = vmatpush1.bf16.msra.mxu0 0
    %135 = vmatprep.subr.bf16.mxu0 0
    %136 = vmatpush1.bf16.msra.mxu0 0
    %137 = vmatprep.subr.bf16.mxu0 0
    %138 = vmatpush1.bf16.msra.mxu0 0
    %139 = vmatprep.subr.bf16.mxu0 0
    %140 = vmatpush1.bf16.msra.mxu0 0
    %141 = vmatprep.subr.bf16.mxu0 0
    %142 = vmatpush1.bf16.msra.mxu0 0
    %143 = vmatprep.subr.bf16.mxu0 0
    %144 = vmatpush1.bf16.msra.mxu0 0
    %145 = vmatprep.subr.bf16.mxu0 0
    %146 = vmatpush1.bf16.msra.mxu0 0
    %147 = vmatprep.subr.bf16.mxu0 0
    %148 = vmatpush1.bf16.msra.mxu0 0
    %149 = vmatprep.subr.bf16.mxu0 0
    %150 = vmatpush1.bf16.msra.mxu0 0
    %151 = vmatprep.subr.bf16.mxu0 0
    %152 = vmatpush1.bf16.msra.mxu0 0
    %153 = vmatprep.mubr.bf16.mxu0 0
    %154 = vmatmul.mubr.bf16.gmra.mrb[0].mxu0 %v112
    %v155 = vpop.f32.mrb[0].mxu0
    %v156 = vadd.f32 0.0, %v155
    %v157 = vpop.f32.mrb[0].mxu0
    %v158 = vadd.f32 0.0, %v157
    %v159 = vpop.f32.mrb[0].mxu0
    %v160 = vpop.f32.mrb[0].mxu0
    %161 = vdwg.mxu0
    %v164 = vunpack.c.l.b16 %v102
    %v165 = vunpack.c.h.b16 %v102
    %v166 = vunpack.c.l.b16 %v103
    %v167 = vunpack.c.h.b16 %v103
    %v168 = vpack.c.b16 %v166, %v164
    %v169 = vpack.c.b16 %v167, %v165
    %vm172 = vcmask 130048
    %v174 = vsel %vm172, %v99, 0
    %176 = vmatprep.subr.bf16.mxu0 %v169
    %177 = vmatpush1.bf16.msra.mxu0 %v168
    %178 = vmatprep.subr.bf16.mxu0 0
    %179 = vmatpush1.bf16.msra.mxu0 0
    %180 = vmatprep.subr.bf16.mxu0 0
    %181 = vmatpush1.bf16.msra.mxu0 0
    %182 = vmatprep.subr.bf16.mxu0 0
    %183 = vmatpush1.bf16.msra.mxu0 0
    %184 = vmatprep.subr.bf16.mxu0 0
    %185 = vmatpush1.bf16.msra.mxu0 0
    %186 = vmatprep.subr.bf16.mxu0 0
    %187 = vmatpush1.bf16.msra.mxu0 0
    %188 = vmatprep.subr.bf16.mxu0 0
    %189 = vmatpush1.bf16.msra.mxu0 0
    %190 = vmatprep.subr.bf16.mxu0 0
    %191 = vmatpush1.bf16.msra.mxu0 0
    %192 = vmatprep.subr.bf16.mxu0 0
    %193 = vmatpush1.bf16.msra.mxu0 0
    %194 = vmatprep.subr.bf16.mxu0 0
    %195 = vmatpush1.bf16.msra.mxu0 0
    %196 = vmatprep.subr.bf16.mxu0 0
    %197 = vmatpush1.bf16.msra.mxu0 0
    %198 = vmatprep.subr.bf16.mxu0 0
    %199 = vmatpush1.bf16.msra.mxu0 0
    %200 = vmatprep.subr.bf16.mxu0 0
    %201 = vmatpush1.bf16.msra.mxu0 0
    %202 = vmatprep.subr.bf16.mxu0 0
    %203 = vmatpush1.bf16.msra.mxu0 0
    %204 = vmatprep.subr.bf16.mxu0 0
    %205 = vmatpush1.bf16.msra.mxu0 0
    %206 = vmatprep.subr.bf16.mxu0 0
    %207 = vmatpush1.bf16.msra.mxu0 0
    %208 = vmatprep.mubr.bf16.mxu0 0
    %209 = vmatmul.mubr.bf16.gmra.mrb[0].mxu0 %v174
    %v210 = vpop.f32.mrb[0].mxu0
    %v211 = vadd.f32 %v156, %v210
    %v212 = vpop.f32.mrb[0].mxu0
    %v213 = vadd.f32 %v158, %v212
    %v214 = vpop.f32.mrb[0].mxu0
    %v215 = vpop.f32.mrb[0].mxu0
    %216 = vdwg.mxu0
    %v217 = vld [vmem:[%s4] sm:$0x3]
    %v219 = vlaneseq
    %v220 = vshrl.u32 %v219, 7
    %v221 = vsub.s32 0, %v220
    %v222 = vrot.slane %v217, %v221
    %v223 = vlaneseq
    %v224 = vshrl.u32 %v223, 7
    %v225 = vsub.s32 1, %v224
    %v226 = vrot.slane %v217, %v225
    %v229 = vadd.f32 %v211, %v222
    %v230 = vadd.f32 %v213, %v226
    %v231 = vmax.f32 %v229, 0.0
    %v232 = vmax.f32 %v230, 0.0
    %v233 = vpack.c.bf16 %v231, %v231
    %v234 = vpack.c.bf16 %v232, %v232
    %v235 = vld [vmem:[#allocation8] sm:$0xff]
    %v236 = vld [vmem:[#allocation8 + $0x8] sm:$0xff]
    %v237 = vld [vmem:[#allocation8 + $0x10] sm:$0xff]
    %v238 = vld [vmem:[#allocation8 + $0x18] sm:$0xff]
    %v239 = vld [vmem:[#allocation8 + $0x20] sm:$0xff]
    %v240 = vld [vmem:[#allocation8 + $0x28] sm:$0xff]
    %v241 = vld [vmem:[#allocation8 + $0x30] sm:$0xff]
    %v242 = vld [vmem:[#allocation8 + $0x38] sm:$0xff]
    %v243 = vld [vmem:[#allocation8 + $0x40] sm:$0xff]
    %v244 = vld [vmem:[#allocation8 + $0x48] sm:$0xff]
    %v245 = vld [vmem:[#allocation8 + $0x50] sm:$0xff]
    %v246 = vld [vmem:[#allocation8 + $0x58] sm:$0xff]
    %v247 = vld [vmem:[#allocation8 + $0x60] sm:$0xff]
    %v248 = vld [vmem:[#allocation8 + $0x68] sm:$0xff]
    %v249 = vld [vmem:[#allocation8 + $0x70] sm:$0xff]
    %v250 = vld [vmem:[#allocation8 + $0x78] sm:$0xff]
    %v251 = vld [vmem:[#allocation8 + $0x80] sm:$0xff]
    %v252 = vld [vmem:[#allocation8 + $0x88] sm:$0xff]
    %v253 = vld [vmem:[#allocation8 + $0x90] sm:$0xff]
    %v254 = vld [vmem:[#allocation8 + $0x98] sm:$0xff]
    %v255 = vld [vmem:[#allocation8 + $0xa0] sm:$0xff]
    %v256 = vld [vmem:[#allocation8 + $0xa8] sm:$0xff]
    %v257 = vld [vmem:[#allocation8 + $0xb0] sm:$0xff]
    %v258 = vld [vmem:[#allocation8 + $0xb8] sm:$0xff]
    %v259 = vld [vmem:[#allocation8 + $0xc0] sm:$0xff]
    %v260 = vld [vmem:[#allocation8 + $0xc8] sm:$0xff]
    %v261 = vld [vmem:[#allocation8 + $0xd0] sm:$0xff]
    %v262 = vld [vmem:[#allocation8 + $0xd8] sm:$0xff]
    %v263 = vld [vmem:[#allocation8 + $0xe0] sm:$0xff]
    %v264 = vld [vmem:[#allocation8 + $0xe8] sm:$0xff]
    %v265 = vld [vmem:[#allocation8 + $0xf0] sm:$0xff]
    %v266 = vld [vmem:[#allocation8 + $0xf8] sm:$0xff]
    %v267 = vld [vmem:[%s6] sm:$0x3]
    %v269 = vlaneseq
    %v270 = vshrl.u32 %v269, 7
    %v271 = vsub.s32 0, %v270
    %v272 = vrot.slane %v267, %v271
    %v273 = vlaneseq
    %v274 = vshrl.u32 %v273, 7
    %v275 = vsub.s32 1, %v274
    %v276 = vrot.slane %v267, %v275
    %v311 = vunpack.c.l.b16 %v235
    %v312 = vunpack.c.h.b16 %v235
    %v313 = vunpack.c.l.b16 %v236
    %v314 = vunpack.c.h.b16 %v236
    %v315 = vunpack.c.l.b16 %v237
    %v316 = vunpack.c.h.b16 %v237
    %v317 = vunpack.c.l.b16 %v238
    %v318 = vunpack.c.h.b16 %v238
    %v319 = vunpack.c.l.b16 %v239
    %v320 = vunpack.c.h.b16 %v239
    %v321 = vunpack.c.l.b16 %v240
    %v322 = vunpack.c.h.b16 %v240
    %v323 = vunpack.c.l.b16 %v241
    %v324 = vunpack.c.h.b16 %v241
    %v325 = vunpack.c.l.b16 %v242
    %v326 = vunpack.c.h.b16 %v242
    %v327 = vunpack.c.l.b16 %v243
    %v328 = vunpack.c.h.b16 %v243
    %v329 = vunpack.c.l.b16 %v244
    %v330 = vunpack.c.h.b16 %v244
    %v331 = vunpack.c.l.b16 %v245
    %v332 = vunpack.c.h.b16 %v245
    %v333 = vunpack.c.l.b16 %v246
    %v334 = vunpack.c.h.b16 %v246
    %v335 = vunpack.c.l.b16 %v247
    %v336 = vunpack.c.h.b16 %v247
    %v337 = vunpack.c.l.b16 %v248
    %v338 = vunpack.c.h.b16 %v248
    %v339 = vunpack.c.l.b16 %v249
    %v340 = vunpack.c.h.b16 %v249
    %v341 = vunpack.c.l.b16 %v250
    %v342 = vunpack.c.h.b16 %v250
    %v343 = vunpack.c.l.b16 %v251
    %v344 = vunpack.c.h.b16 %v251
    %v345 = vunpack.c.l.b16 %v252
    %v346 = vunpack.c.h.b16 %v252
    %v347 = vunpack.c.l.b16 %v253
    %v348 = vunpack.c.h.b16 %v253
    %v349 = vunpack.c.l.b16 %v254
    %v350 = vunpack.c.h.b16 %v254
    %v351 = vunpack.c.l.b16 %v255
    %v352 = vunpack.c.h.b16 %v255
    %v353 = vunpack.c.l.b16 %v256
    %v354 = vunpack.c.h.b16 %v256
    %v355 = vunpack.c.l.b16 %v257
    %v356 = vunpack.c.h.b16 %v257
    %v357 = vunpack.c.l.b16 %v258
    %v358 = vunpack.c.h.b16 %v258
    %v359 = vunpack.c.l.b16 %v259
    %v360 = vunpack.c.h.b16 %v259
    %v361 = vunpack.c.l.b16 %v260
    %v362 = vunpack.c.h.b16 %v260
    %v363 = vunpack.c.l.b16 %v261
    %v364 = vunpack.c.h.b16 %v261
    %v365 = vunpack.c.l.b16 %v262
    %v366 = vunpack.c.h.b16 %v262
    %v367 = vunpack.c.l.b16 %v263
    %v368 = vunpack.c.h.b16 %v263
    %v369 = vunpack.c.l.b16 %v264
    %v370 = vunpack.c.h.b16 %v264
    %v371 = vunpack.c.l.b16 %v265
    %v372 = vunpack.c.h.b16 %v265
    %v373 = vunpack.c.l.b16 %v266
    %v374 = vunpack.c.h.b16 %v266
    %v375 = vpack.c.b16 %v313, %v311
    %v376 = vpack.c.b16 %v314, %v312
    %v377 = vpack.c.b16 %v317, %v315
    %v378 = vpack.c.b16 %v318, %v316
    %v379 = vpack.c.b16 %v321, %v319
    %v380 = vpack.c.b16 %v322, %v320
    %v381 = vpack.c.b16 %v325, %v323
    %v382 = vpack.c.b16 %v326, %v324
    %v383 = vpack.c.b16 %v329, %v327
    %v384 = vpack.c.b16 %v330, %v328
    %v385 = vpack.c.b16 %v333, %v331
    %v386 = vpack.c.b16 %v334, %v332
    %v387 = vpack.c.b16 %v337, %v335
    %v388 = vpack.c.b16 %v338, %v336
    %v389 = vpack.c.b16 %v341, %v339
    %v390 = vpack.c.b16 %v342, %v340
    %v391 = vpack.c.b16 %v345, %v343
    %v392 = vpack.c.b16 %v346, %v344
    %v393 = vpack.c.b16 %v349, %v347
    %v394 = vpack.c.b16 %v350, %v348
    %v395 = vpack.c.b16 %v353, %v351
    %v396 = vpack.c.b16 %v354, %v352
    %v397 = vpack.c.b16 %v357, %v355
    %v398 = vpack.c.b16 %v358, %v356
    %v399 = vpack.c.b16 %v361, %v359
    %v400 = vpack.c.b16 %v362, %v360
    %v401 = vpack.c.b16 %v365, %v363
    %v402 = vpack.c.b16 %v366, %v364
    %v403 = vpack.c.b16 %v369, %v367
    %v404 = vpack.c.b16 %v370, %v368
    %v405 = vpack.c.b16 %v373, %v371
    %v406 = vpack.c.b16 %v374, %v372
    %439 = vmatprep.subr.bf16.mxu0 %v376
    %440 = vmatpush1.bf16.msra.mxu0 %v375
    %441 = vmatprep.subr.bf16.mxu0 %v378
    %442 = vmatpush1.bf16.msra.mxu0 %v377
    %443 = vmatprep.subr.bf16.mxu0 %v380
    %444 = vmatpush1.bf16.msra.mxu0 %v379
    %445 = vmatprep.subr.bf16.mxu0 %v382
    %446 = vmatpush1.bf16.msra.mxu0 %v381
    %447 = vmatprep.subr.bf16.mxu0 %v384
    %448 = vmatpush1.bf16.msra.mxu0 %v383
    %449 = vmatprep.subr.bf16.mxu0 %v386
    %450 = vmatpush1.bf16.msra.mxu0 %v385
    %451 = vmatprep.subr.bf16.mxu0 %v388
    %452 = vmatpush1.bf16.msra.mxu0 %v387
    %453 = vmatprep.subr.bf16.mxu0 %v390
    %454 = vmatpush1.bf16.msra.mxu0 %v389
    %455 = vmatprep.subr.bf16.mxu0 %v392
    %456 = vmatpush1.bf16.msra.mxu0 %v391
    %457 = vmatprep.subr.bf16.mxu0 %v394
    %458 = vmatpush1.bf16.msra.mxu0 %v393
    %459 = vmatprep.subr.bf16.mxu0 %v396
    %460 = vmatpush1.bf16.msra.mxu0 %v395
    %461 = vmatprep.subr.bf16.mxu0 %v398
    %462 = vmatpush1.bf16.msra.mxu0 %v397
    %463 = vmatprep.subr.bf16.mxu0 %v400
    %464 = vmatpush1.bf16.msra.mxu0 %v399
    %465 = vmatprep.subr.bf16.mxu0 %v402
    %466 = vmatpush1.bf16.msra.mxu0 %v401
    %467 = vmatprep.subr.bf16.mxu0 %v404
    %468 = vmatpush1.bf16.msra.mxu0 %v403
    %469 = vmatprep.subr.bf16.mxu0 %v406
    %470 = vmatpush1.bf16.msra.mxu0 %v405
    %471 = vmatprep.mubr.bf16.mxu0 %v234
    %472 = vmatmul.mubr.bf16.gmra.mrb[0].mxu0 %v233
    %v473 = vpop.f32.mrb[0].mxu0
    %v474 = vadd.f32 %v272, %v473
    %v475 = vpop.f32.mrb[0].mxu0
    %v476 = vadd.f32 %v276, %v475
    %v477 = vpop.f32.mrb[0].mxu0
    %v478 = vpop.f32.mrb[0].mxu0
    %479 = vdwg.mxu0
    %v480 = vmax.f32 %v474, 0.0
    %v481 = vmax.f32 %v476, 0.0
    %v482 = vpack.c.bf16 %v480, %v480
    %v483 = vpack.c.bf16 %v481, %v481
    %v484 = vld [vmem:[#allocation10] sm:$0xf]
    %v485 = vld [vmem:[#allocation10 + $0x4] sm:$0xf]
    %v486 = vld [vmem:[#allocation10 + $0x8] sm:$0xf]
    %v487 = vld [vmem:[#allocation10 + $0xc] sm:$0xf]
    %v488 = vld [vmem:[#allocation10 + $0x10] sm:$0xf]
    %v489 = vld [vmem:[#allocation10 + $0x14] sm:$0xf]
    %v490 = vld [vmem:[#allocation10 + $0x18] sm:$0xf]
    %v491 = vld [vmem:[#allocation10 + $0x1c] sm:$0xf]
    %v492 = vld [vmem:[#allocation10 + $0x20] sm:$0xf]
    %v493 = vld [vmem:[#allocation10 + $0x24] sm:$0xf]
    %v494 = vld [vmem:[#allocation10 + $0x28] sm:$0xf]
    %v495 = vld [vmem:[#allocation10 + $0x2c] sm:$0xf]
    %v496 = vld [vmem:[#allocation10 + $0x30] sm:$0xf]
    %v497 = vld [vmem:[#allocation10 + $0x34] sm:$0xf]
    %v498 = vld [vmem:[#allocation10 + $0x38] sm:$0xf]
    %v499 = vld [vmem:[#allocation10 + $0x3c] sm:$0xf]
    %v500 = vld [vmem:[#allocation10 + $0x40] sm:$0xf]
    %v501 = vld [vmem:[#allocation10 + $0x44] sm:$0xf]
    %v502 = vld [vmem:[#allocation10 + $0x48] sm:$0xf]
    %v503 = vld [vmem:[#allocation10 + $0x4c] sm:$0xf]
    %v504 = vld [vmem:[#allocation10 + $0x50] sm:$0xf]
    %v505 = vld [vmem:[#allocation10 + $0x54] sm:$0xf]
    %v506 = vld [vmem:[#allocation10 + $0x58] sm:$0xf]
    %v507 = vld [vmem:[#allocation10 + $0x5c] sm:$0xf]
    %v508 = vld [vmem:[#allocation10 + $0x60] sm:$0xf]
    %v509 = vld [vmem:[#allocation10 + $0x64] sm:$0xf]
    %v510 = vld [vmem:[#allocation10 + $0x68] sm:$0xf]
    %v511 = vld [vmem:[#allocation10 + $0x6c] sm:$0xf]
    %v512 = vld [vmem:[#allocation10 + $0x70] sm:$0xf]
    %v513 = vld [vmem:[#allocation10 + $0x74] sm:$0xf]
    %v514 = vld [vmem:[#allocation10 + $0x78] sm:$0xf]
    %v515 = vld [vmem:[#allocation10 + $0x7c] sm:$0xf]
    %v516 = vld [vmem:[%s8] sm:$0x1]
    %v518 = vlaneseq
    %v519 = vshrl.u32 %v518, 7
    %v520 = vsub.s32 0, %v519
    %v521 = vrot.slane %v516, %v520
    %v555 = vunpack.c.l.b16 %v484
    %v556 = vunpack.c.l.b16 %v485
    %v557 = vunpack.c.l.b16 %v486
    %v558 = vunpack.c.l.b16 %v487
    %v559 = vunpack.c.l.b16 %v488
    %v560 = vunpack.c.l.b16 %v489
    %v561 = vunpack.c.l.b16 %v490
    %v562 = vunpack.c.l.b16 %v491
    %v563 = vunpack.c.l.b16 %v492
    %v564 = vunpack.c.l.b16 %v493
    %v565 = vunpack.c.l.b16 %v494
    %v566 = vunpack.c.l.b16 %v495
    %v567 = vunpack.c.l.b16 %v496
    %v568 = vunpack.c.l.b16 %v497
    %v569 = vunpack.c.l.b16 %v498
    %v570 = vunpack.c.l.b16 %v499
    %v571 = vunpack.c.l.b16 %v500
    %v572 = vunpack.c.l.b16 %v501
    %v573 = vunpack.c.l.b16 %v502
    %v574 = vunpack.c.l.b16 %v503
    %v575 = vunpack.c.l.b16 %v504
    %v576 = vunpack.c.l.b16 %v505
    %v577 = vunpack.c.l.b16 %v506
    %v578 = vunpack.c.l.b16 %v507
    %v579 = vunpack.c.l.b16 %v508
    %v580 = vunpack.c.l.b16 %v509
    %v581 = vunpack.c.l.b16 %v510
    %v582 = vunpack.c.l.b16 %v511
    %v583 = vunpack.c.l.b16 %v512
    %v584 = vunpack.c.l.b16 %v513
    %v585 = vunpack.c.l.b16 %v514
    %v586 = vunpack.c.l.b16 %v515
    %v587 = vpack.c.b16 %v556, %v555
    %v588 = vpack.c.b16 %v558, %v557
    %v589 = vpack.c.b16 %v560, %v559
    %v590 = vpack.c.b16 %v562, %v561
    %v591 = vpack.c.b16 %v564, %v563
    %v592 = vpack.c.b16 %v566, %v565
    %v593 = vpack.c.b16 %v568, %v567
    %v594 = vpack.c.b16 %v570, %v569
    %v595 = vpack.c.b16 %v572, %v571
    %v596 = vpack.c.b16 %v574, %v573
    %v597 = vpack.c.b16 %v576, %v575
    %v598 = vpack.c.b16 %v578, %v577
    %v599 = vpack.c.b16 %v580, %v579
    %v600 = vpack.c.b16 %v582, %v581
    %v601 = vpack.c.b16 %v584, %v583
    %v602 = vpack.c.b16 %v586, %v585
    %619 = vmatprep.subr.bf16.mxu0 0
    %620 = vmatpush1.bf16.msra.mxu0 %v587
    %621 = vmatprep.subr.bf16.mxu0 0
    %622 = vmatpush1.bf16.msra.mxu0 %v588
    %623 = vmatprep.subr.bf16.mxu0 0
    %624 = vmatpush1.bf16.msra.mxu0 %v589
    %625 = vmatprep.subr.bf16.mxu0 0
    %626 = vmatpush1.bf16.msra.mxu0 %v590
    %627 = vmatprep.subr.bf16.mxu0 0
    %628 = vmatpush1.bf16.msra.mxu0 %v591
    %629 = vmatprep.subr.bf16.mxu0 0
    %630 = vmatpush1.bf16.msra.mxu0 %v592
    %631 = vmatprep.subr.bf16.mxu0 0
    %632 = vmatpush1.bf16.msra.mxu0 %v593
    %633 = vmatprep.subr.bf16.mxu0 0
    %634 = vmatpush1.bf16.msra.mxu0 %v594
    %635 = vmatprep.subr.bf16.mxu0 0
    %636 = vmatpush1.bf16.msra.mxu0 %v595
    %637 = vmatprep.subr.bf16.mxu0 0
    %638 = vmatpush1.bf16.msra.mxu0 %v596
    %639 = vmatprep.subr.bf16.mxu0 0
    %640 = vmatpush1.bf16.msra.mxu0 %v597
    %641 = vmatprep.subr.bf16.mxu0 0
    %642 = vmatpush1.bf16.msra.mxu0 %v598
    %643 = vmatprep.subr.bf16.mxu0 0
    %644 = vmatpush1.bf16.msra.mxu0 %v599
    %645 = vmatprep.subr.bf16.mxu0 0
    %646 = vmatpush1.bf16.msra.mxu0 %v600
    %647 = vmatprep.subr.bf16.mxu0 0
    %648 = vmatpush1.bf16.msra.mxu0 %v601
    %649 = vmatprep.subr.bf16.mxu0 0
    %650 = vmatpush1.bf16.msra.mxu0 %v602
    %651 = vmatprep.mubr.bf16.mxu0 %v483
    %652 = vmatmul.mubr.bf16.gmra.mrb[0].mxu0 %v482
    %v653 = vpop.f32.mrb[0].mxu0
    %v654 = vadd.f32 %v521, %v653
    %v655 = vpop.f32.mrb[0].mxu0
    %v656 = vpop.f32.mrb[0].mxu0
    %v657 = vpop.f32.mrb[0].mxu0
    %658 = vdwg.mxu0
    %659 = vst [vmem:[#allocation11] sm:$0xff] %v654
    // Predicated region
    $region58: #{tpu_custom_call.1} parent=1 // pred_check
      _
    $region59: #{tpu_custom_call.1} parent=1 // pred_check_branch
      %661 = sbr.rel (0) target = $region61
    $region60: #{tpu_custom_call.1} parent=1 // pred_region
      %s663 = ssub.s32 128, 128
      %664 = vsyncadd [#allocation4], %s663
      %s666 = sshll.u32 [#allocation11], 4
      %s667 = int_to_ptr.vmem [resolvable:$true] %s666
      %669 = dma.vmem_to_hbm [thread:$0]  %s667, 128, %s9, [#allocation4]
    $region61: #{tpu_custom_call.1} parent=1 // pred_fallthru
      _
    // Predicated region
    $region62: #{tpu_custom_call.1} parent=1 // pred_check
      _
    $region63: #{tpu_custom_call.1} parent=1 // pred_check_branch
      %671 = sbr.rel (0) target = $region65
    $region64: #{tpu_custom_call.1} parent=1 // pred_region
      %672 = dma.done [#allocation4], 128
    $region65: #{tpu_custom_call.1} parent=1 // pred_fallthru
      _
    %673 = vsyncpa [#allocation3], 1
    %674 = vsyncpa [#allocation6], 1
    %675 = vsyncpa [#allocation9], 1
    %676 = vsyncpa [#allocation4], 1

</llo_original>
